<compile_context>
chip_gen: v7x
topology: tpu7x:2x2x1
jax: 0.10.0
libtpu: 0.0.40
codegen_flags: <defaults>
</compile_context>

<pallas_src>
import functools
import math

import jax
import jax.numpy as jnp
from jax.experimental import pallas as pl
from jax.experimental.pallas import tpu as pltpu


def _decomp_kernel(w_ref, b_ref, x_ref, res_ref, mean_ref, *, kernel_sizes, seq_len):
    n = len(kernel_sizes)
    L = seq_len

    # x block is (1, L, TC); squeeze the batch dim.
    x = x_ref[0].astype(jnp.float32)                       # (L, TC)
    tc = x.shape[-1]

    # Shared edge-replicated copy of x along the sublane (sequence) axis. Each kernel
    # size k uses a window of it starting at front_max - front_k.
    kmax = max(kernel_sizes)
    front_max = kmax - 1 - (kmax - 1) // 2
    end_max = (kmax - 1) // 2
    parts = []
    if front_max > 0:
        parts.append(jnp.broadcast_to(x[0:1, :], (front_max, tc)))
    parts.append(x)
    if end_max > 0:
        parts.append(jnp.broadcast_to(x[L - 1:L, :], (end_max, tc)))
    xp = jnp.concatenate(parts, axis=0) if len(parts) > 1 else x

    # Cache the n logits (they are reused by both the max pass and the exp pass).
    logits = [x * w_ref[j] + b_ref[j] for j in range(n)]
    m = logits[0]
    for j in range(1, n):
        m = jnp.maximum(m, logits[j])

    denom = jnp.zeros_like(x)
    weighted = jnp.zeros_like(x)
    for j, k in enumerate(kernel_sizes):
        front_k = k - 1 - (k - 1) // 2
        off = front_max - front_k
        # Replicate-padded moving average of width k: k shifted sublane slices, f32 adds.
        acc = xp[off:off + L, :]
        for t in range(1, k):
            acc = acc + xp[off + t:off + t + L, :]
        mean_j = acc * (1.0 / k)

        e_j = jnp.exp(logits[j] - m)                        # EUP
        denom = denom + e_j
        weighted = weighted + mean_j * e_j

    # EUP reciprocal + one Newton step -> ~f32-exact, keeps the divide off the VALU slot.
    inv = pl.reciprocal(denom, approx=True)
    inv = inv * (2.0 - denom * inv)
    moving_mean = weighted * inv                            # (L, TC)

    mean_ref[0] = moving_mean.astype(mean_ref.dtype)
    res_ref[0] = (x - moving_mean).astype(res_ref.dtype)


def series_decomp_multi(x, weight, bias, kernel_sizes):
    """x: (B, L, C). weight: (n,) flattened nn.Linear(1, n).weight. bias: (n,)."""
    B, L, C = x.shape
    n = len(kernel_sizes)
    weight = jnp.asarray(weight, jnp.float32).reshape(n)
    bias = jnp.asarray(bias, jnp.float32).reshape(n)

    itemsize = jnp.dtype(x.dtype).itemsize
    kmax = max(kernel_sizes)
    pad_rows = kmax - 1

    # Generation-aware VMEM ceiling (≈3/4 of physical: ~96 MiB on v5e/v6e, ~48 MiB on v7x).
    try:
        vmem_cap = int(pltpu.get_tpu_info().vmem_capacity_bytes)
    except Exception:
        vmem_cap = 64 << 20
    cap = max((vmem_cap * 3) // 4, 16 << 20)

    def vmem_estimate(tc):
        io = 3 * 2 * L * tc * itemsize                      # x, res, mean double-buffered
        tmp = (n + 6) * (L + pad_rows) * tc * 4             # live f32 temporaries
        return io + tmp + (4 << 20)

    if C % 128 == 0:
        # Lane-dense channel tiles (unmasked stores).
        TC = math.gcd(C, 512)
        while TC > 128 and vmem_estimate(TC) > cap:
            TC //= 2
        c_steps = C // TC
        # Make sure the grid has >= 2 steps when possible (pipelining; both v7x cores busy).
        if B * c_steps == 1 and TC >= 256:
            TC //= 2
            c_steps = C // TC
    else:
        # Ragged channel count: take the whole channel axis in one block (masked lane
        # stores) rather than paying host-side pad + output-slice HBM round-trips.
        TC = C
        c_steps = 1

    grid = (B, c_steps)
    vmem_limit = int(min(max(vmem_estimate(TC), 16 << 20), cap))

    kern = functools.partial(
        _decomp_kernel, kernel_sizes=tuple(int(k) for k in kernel_sizes), seq_len=L)

    res, mean = pl.pallas_call(
        kern,
        out_shape=(
            jax.ShapeDtypeStruct((B, L, C), x.dtype),
            jax.ShapeDtypeStruct((B, L, C), x.dtype),
        ),
        grid=grid,
        in_specs=[
            pl.BlockSpec(memory_space=pltpu.MemorySpace.SMEM),      # weight (n,)
            pl.BlockSpec(memory_space=pltpu.MemorySpace.SMEM),      # bias   (n,)
            pl.BlockSpec((1, L, TC), lambda b, c: (b, 0, c)),       # x tile
        ],
        out_specs=(
            pl.BlockSpec((1, L, TC), lambda b, c: (b, 0, c)),
            pl.BlockSpec((1, L, TC), lambda b, c: (b, 0, c)),
        ),
        compiler_params=pltpu.CompilerParams(
            dimension_semantics=("parallel", "parallel"),
            vmem_limit_bytes=vmem_limit,
        ),
    )(weight, bias, x)

    return res, mean


def _reference(x, weight, bias, kernel_sizes):
    # Pure-JAX reference mirroring the PyTorch forward.
    B, L, C = x.shape
    means = []
    for k in kernel_sizes:
        front_pad = k - 1 - (k - 1) // 2
        end_pad = (k - 1) // 2
        front = jnp.repeat(x[:, 0:1, :], front_pad, axis=1)
        end = jnp.repeat(x[:, L - 1:L, :], end_pad, axis=1)
        xp = jnp.concatenate([front, x, end], axis=1)
        windows = jnp.stack([xp[:, i:i + L, :] for i in range(k)], axis=0)
        means.append(jnp.mean(windows, axis=0))
    moving_mean = jnp.stack(means, axis=-1)                      # (B, L, C, n)
    logits = x[..., None] * weight[None, None, None, :] + bias   # (B, L, C, n)
    w = jax.nn.softmax(logits, axis=-1)
    mm = jnp.sum(moving_mean * w, axis=-1)
    return x - mm, mm


if __name__ == "__main__":
    kernel_sizes = (3, 5, 7)
    B, L, C = 2, 16, 8

    key = jax.random.PRNGKey(0)
    kx, kw, kb = jax.random.split(key, 3)
    x = jax.random.normal(kx, (B, L, C), dtype=jnp.float32)

    # nn.Linear(1, len(kernel_sizes)): weight (n, 1), bias (n,) — deterministic synthetic init.
    n = len(kernel_sizes)
    weight = (jax.random.uniform(kw, (n, 1), dtype=jnp.float32) - 0.5).reshape(n)
    bias = jax.random.uniform(kb, (n,), dtype=jnp.float32) - 0.5

    res, mean = series_decomp_multi(x, weight, bias, kernel_sizes)
    res, mean = jax.block_until_ready((res, mean))

    res_ref, mean_ref = _reference(x, weight, bias, kernel_sizes)
    assert jnp.allclose(res, res_ref, rtol=1e-4, atol=1e-4), "res mismatch"
    assert jnp.allclose(mean, mean_ref, rtol=1e-4, atol=1e-4), "mean mismatch"

    print("KERNEL_OK")
</pallas_src>

<mosaic_0001>
module attributes {stable_mosaic.version = 11 : i64} {
  func.func @_decomp_kernel(%arg0: i32, %arg1: i32, %arg2: memref<3xf32, #tpu.memory_space<smem>>, %arg3: memref<3xf32, #tpu.memory_space<smem>>, %arg4: memref<1x16x8xf32, #tpu.memory_space<vmem>>, %arg5: memref<1x16x8xf32, #tpu.memory_space<vmem>>, %arg6: memref<1x16x8xf32, #tpu.memory_space<vmem>>) attributes {dimension_semantics = [#tpu.dimension_semantics<parallel>, #tpu.dimension_semantics<parallel>], iteration_bounds = array<i64: 2, 1>, scalar_prefetch = 0 : i64, scratch_operands = 0 : i64, tpu.core_type = #tpu.core_type<tc>, window_params = [{transform_indices = @transform_0, window_bounds = array<i64: 3>}, {transform_indices = @transform_1, window_bounds = array<i64: 3>}, {transform_indices = @transform_2, window_bounds = array<i64: 1, 16, 8>}, {transform_indices = @transform_3, window_bounds = array<i64: 1, 16, 8>}, {transform_indices = @transform_4, window_bounds = array<i64: 1, 16, 8>}]} {
    %c0 = arith.constant 0 : index
    %c0_0 = arith.constant 0 : index
    %c0_1 = arith.constant 0 : index
    %0 = vector.load %arg4[%c0, %c0_0, %c0_1] : memref<1x16x8xf32, #tpu.memory_space<vmem>>, vector<1x16x8xf32>
    %1 = vector.shape_cast %0 : vector<1x16x8xf32> to vector<16x8xf32>
    %2 = vector.extract_strided_slice %1 {offsets = [0, 0], sizes = [1, 8], strides = [1, 1]} : vector<16x8xf32> to vector<1x8xf32>
    %3 = vector.shape_cast %2 : vector<1x8xf32> to vector<1x8xf32>
    %4 = vector.broadcast %3 : vector<1x8xf32> to vector<3x8xf32>
    %5 = vector.extract_strided_slice %1 {offsets = [15, 0], sizes = [1, 8], strides = [1, 1]} : vector<16x8xf32> to vector<1x8xf32>
    %6 = vector.shape_cast %5 : vector<1x8xf32> to vector<1x8xf32>
    %7 = vector.broadcast %6 : vector<1x8xf32> to vector<3x8xf32>
    %8 = tpu.concatenate %4, %1, %7 in 0 : vector<3x8xf32>, vector<16x8xf32>, vector<3x8xf32> -> vector<22x8xf32>
    %c0_2 = arith.constant 0 : index
    %9 = memref.load %arg2[%c0_2] : memref<3xf32, #tpu.memory_space<smem>>
    %10 = vector.broadcast %9 : f32 to vector<16x8xf32>
    %11 = arith.mulf %1, %10 : vector<16x8xf32>
    %c0_3 = arith.constant 0 : index
    %12 = memref.load %arg3[%c0_3] : memref<3xf32, #tpu.memory_space<smem>>
    %13 = vector.broadcast %12 : f32 to vector<16x8xf32>
    %14 = arith.addf %11, %13 : vector<16x8xf32>
    %c1 = arith.constant 1 : index
    %15 = memref.load %arg2[%c1] : memref<3xf32, #tpu.memory_space<smem>>
    %16 = vector.broadcast %15 : f32 to vector<16x8xf32>
    %17 = arith.mulf %1, %16 : vector<16x8xf32>
    %c1_4 = arith.constant 1 : index
    %18 = memref.load %arg3[%c1_4] : memref<3xf32, #tpu.memory_space<smem>>
    %19 = vector.broadcast %18 : f32 to vector<16x8xf32>
    %20 = arith.addf %17, %19 : vector<16x8xf32>
    %c2 = arith.constant 2 : index
    %21 = memref.load %arg2[%c2] : memref<3xf32, #tpu.memory_space<smem>>
    %22 = vector.broadcast %21 : f32 to vector<16x8xf32>
    %23 = arith.mulf %1, %22 : vector<16x8xf32>
    %c2_5 = arith.constant 2 : index
    %24 = memref.load %arg3[%c2_5] : memref<3xf32, #tpu.memory_space<smem>>
    %25 = vector.broadcast %24 : f32 to vector<16x8xf32>
    %26 = arith.addf %23, %25 : vector<16x8xf32>
    %27 = arith.maximumf %14, %20 : vector<16x8xf32>
    %28 = arith.maximumf %27, %26 : vector<16x8xf32>
    %cst = arith.constant 0.000000e+00 : f32
    %29 = vector.broadcast %cst : f32 to vector<16x8xf32>
    %cst_6 = arith.constant 0.000000e+00 : f32
    %30 = vector.broadcast %cst_6 : f32 to vector<16x8xf32>
    %31 = vector.extract_strided_slice %8 {offsets = [2, 0], sizes = [16, 8], strides = [1, 1]} : vector<22x8xf32> to vector<16x8xf32>
    %32 = vector.extract_strided_slice %8 {offsets = [3, 0], sizes = [16, 8], strides = [1, 1]} : vector<22x8xf32> to vector<16x8xf32>
    %33 = arith.addf %31, %32 : vector<16x8xf32>
    %34 = vector.extract_strided_slice %8 {offsets = [4, 0], sizes = [16, 8], strides = [1, 1]} : vector<22x8xf32> to vector<16x8xf32>
    %35 = arith.addf %33, %34 : vector<16x8xf32>
    %cst_7 = arith.constant 0.333333343 : f32
    %36 = vector.broadcast %cst_7 : f32 to vector<16x8xf32>
    %37 = arith.mulf %35, %36 : vector<16x8xf32>
    %38 = arith.subf %14, %28 : vector<16x8xf32>
    %39 = math.exp %38 : vector<16x8xf32>
    %40 = arith.addf %29, %39 : vector<16x8xf32>
    %41 = arith.mulf %37, %39 : vector<16x8xf32>
    %42 = arith.addf %30, %41 : vector<16x8xf32>
    %43 = vector.extract_strided_slice %8 {offsets = [1, 0], sizes = [16, 8], strides = [1, 1]} : vector<22x8xf32> to vector<16x8xf32>
    %44 = vector.extract_strided_slice %8 {offsets = [2, 0], sizes = [16, 8], strides = [1, 1]} : vector<22x8xf32> to vector<16x8xf32>
    %45 = arith.addf %43, %44 : vector<16x8xf32>
    %46 = vector.extract_strided_slice %8 {offsets = [3, 0], sizes = [16, 8], strides = [1, 1]} : vector<22x8xf32> to vector<16x8xf32>
    %47 = arith.addf %45, %46 : vector<16x8xf32>
    %48 = vector.extract_strided_slice %8 {offsets = [4, 0], sizes = [16, 8], strides = [1, 1]} : vector<22x8xf32> to vector<16x8xf32>
    %49 = arith.addf %47, %48 : vector<16x8xf32>
    %50 = vector.extract_strided_slice %8 {offsets = [5, 0], sizes = [16, 8], strides = [1, 1]} : vector<22x8xf32> to vector<16x8xf32>
    %51 = arith.addf %49, %50 : vector<16x8xf32>
    %cst_8 = arith.constant 2.000000e-01 : f32
    %52 = vector.broadcast %cst_8 : f32 to vector<16x8xf32>
    %53 = arith.mulf %51, %52 : vector<16x8xf32>
    %54 = arith.subf %20, %28 : vector<16x8xf32>
    %55 = math.exp %54 : vector<16x8xf32>
    %56 = arith.addf %40, %55 : vector<16x8xf32>
    %57 = arith.mulf %53, %55 : vector<16x8xf32>
    %58 = arith.addf %42, %57 : vector<16x8xf32>
    %59 = vector.extract_strided_slice %8 {offsets = [0, 0], sizes = [16, 8], strides = [1, 1]} : vector<22x8xf32> to vector<16x8xf32>
    %60 = vector.extract_strided_slice %8 {offsets = [1, 0], sizes = [16, 8], strides = [1, 1]} : vector<22x8xf32> to vector<16x8xf32>
    %61 = arith.addf %59, %60 : vector<16x8xf32>
    %62 = vector.extract_strided_slice %8 {offsets = [2, 0], sizes = [16, 8], strides = [1, 1]} : vector<22x8xf32> to vector<16x8xf32>
    %63 = arith.addf %61, %62 : vector<16x8xf32>
    %64 = vector.extract_strided_slice %8 {offsets = [3, 0], sizes = [16, 8], strides = [1, 1]} : vector<22x8xf32> to vector<16x8xf32>
    %65 = arith.addf %63, %64 : vector<16x8xf32>
    %66 = vector.extract_strided_slice %8 {offsets = [4, 0], sizes = [16, 8], strides = [1, 1]} : vector<22x8xf32> to vector<16x8xf32>
    %67 = arith.addf %65, %66 : vector<16x8xf32>
    %68 = vector.extract_strided_slice %8 {offsets = [5, 0], sizes = [16, 8], strides = [1, 1]} : vector<22x8xf32> to vector<16x8xf32>
    %69 = arith.addf %67, %68 : vector<16x8xf32>
    %70 = vector.extract_strided_slice %8 {offsets = [6, 0], sizes = [16, 8], strides = [1, 1]} : vector<22x8xf32> to vector<16x8xf32>
    %71 = arith.addf %69, %70 : vector<16x8xf32>
    %cst_9 = arith.constant 0.142857149 : f32
    %72 = vector.broadcast %cst_9 : f32 to vector<16x8xf32>
    %73 = arith.mulf %71, %72 : vector<16x8xf32>
    %74 = arith.subf %26, %28 : vector<16x8xf32>
    %75 = math.exp %74 : vector<16x8xf32>
    %76 = arith.addf %56, %75 : vector<16x8xf32>
    %77 = arith.mulf %73, %75 : vector<16x8xf32>
    %78 = arith.addf %58, %77 : vector<16x8xf32>
    %79 = tpu.reciprocal %76 {approx = true} : vector<16x8xf32> -> vector<16x8xf32>
    %80 = arith.mulf %76, %79 : vector<16x8xf32>
    %cst_10 = arith.constant 2.000000e+00 : f32
    %81 = vector.broadcast %cst_10 : f32 to vector<16x8xf32>
    %82 = arith.subf %81, %80 : vector<16x8xf32>
    %83 = arith.mulf %79, %82 : vector<16x8xf32>
    %84 = arith.mulf %78, %83 : vector<16x8xf32>
    %c0_11 = arith.constant 0 : index
    %c0_12 = arith.constant 0 : index
    %c0_13 = arith.constant 0 : index
    %85 = vector.load %arg6[%c0_11, %c0_12, %c0_13] : memref<1x16x8xf32, #tpu.memory_space<vmem>>, vector<1x16x8xf32>
    %86 = vector.shape_cast %85 : vector<1x16x8xf32> to vector<16x8xf32>
    %87 = vector.shape_cast %84 : vector<16x8xf32> to vector<1x16x8xf32>
    tpu.vector_store %arg6[%c0_11, %c0_12, %c0_13], %87 {strides = array<i32>} : memref<1x16x8xf32, #tpu.memory_space<vmem>>, vector<1x16x8xf32>,
    %88 = arith.subf %1, %84 : vector<16x8xf32>
    %c0_14 = arith.constant 0 : index
    %c0_15 = arith.constant 0 : index
    %c0_16 = arith.constant 0 : index
    %89 = vector.load %arg5[%c0_14, %c0_15, %c0_16] : memref<1x16x8xf32, #tpu.memory_space<vmem>>, vector<1x16x8xf32>
    %90 = vector.shape_cast %89 : vector<1x16x8xf32> to vector<16x8xf32>
    %91 = vector.shape_cast %88 : vector<16x8xf32> to vector<1x16x8xf32>
    tpu.vector_store %arg5[%c0_14, %c0_15, %c0_16], %91 {strides = array<i32>} : memref<1x16x8xf32, #tpu.memory_space<vmem>>, vector<1x16x8xf32>,
    return
  }
  func.func @transform_0(%arg0: i32, %arg1: i32) -> i32 {
    %c0_i32 = arith.constant 0 : i32
    %c0_i32_0 = arith.constant 0 : i32
    return %c0_i32 : i32
  }
  func.func @transform_1(%arg0: i32, %arg1: i32) -> i32 {
    %c0_i32 = arith.constant 0 : i32
    %c0_i32_0 = arith.constant 0 : i32
    return %c0_i32 : i32
  }
  func.func @transform_2(%arg0: i32, %arg1: i32) -> (i32, i32, i32) {
    %c0_i32 = arith.constant 0 : i32
    %c0_i32_0 = arith.constant 0 : i32
    return %arg0, %c0_i32, %arg1 : i32, i32, i32
  }
  func.func @transform_3(%arg0: i32, %arg1: i32) -> (i32, i32, i32) {
    %c0_i32 = arith.constant 0 : i32
    %c0_i32_0 = arith.constant 0 : i32
    return %arg0, %c0_i32, %arg1 : i32, i32, i32
  }
  func.func @transform_4(%arg0: i32, %arg1: i32) -> (i32, i32, i32) {
    %c0_i32 = arith.constant 0 : i32
    %c0_i32_0 = arith.constant 0 : i32
    return %arg0, %c0_i32, %arg1 : i32, i32, i32
  }
}

</mosaic_0001>

<llo_original>
// kernel: tpu_custom_call.1
$region0: #{tpu_custom_call.1}
  #allocation0 [shape = 'u32[]', space=smem, size = 0x4, offset = 0x4, fixed_abs, tag = 'smem constant byte address 0x4 - core index']
  #allocation1 [shape = 'u32[144,128]{1,0:T(1,128)}', space=vmem, size = 0x12000, scoped, tag = 'internal scratch']
  %s0 = inlined_call_operand.vmem [shape: f32[3], index: 0, kind: input, shape index: {}]
  %s1 = inlined_call_operand.vmem [shape: f32[3], index: 1, kind: input, shape index: {}]
  %s2 = inlined_call_operand.vmem [shape: f32[2,16,8], index: 2, kind: input, shape index: {}]
  %s3 = inlined_call_operand.vmem [shape: f32[2,16,8], index: 3, kind: output, shape index: {0}]
  %s4 = inlined_call_operand.vmem [shape: f32[2,16,8], index: 4, kind: output, shape index: {1}]
  %5 = xla_tuple %s3, %s4
  %s6 = sld [smem:[#allocation0]]
  $region61: #{tpu_custom_call.1} parent=0
    _
  %s8 = ssub.s32 1, %s6
  %s9 = scalar_select 0, %s8, %s6
  $region1: #{tpu_custom_call.1} parent=0
    #allocation2 [shape = 'u8[512]{0}', space=smem, size = 0x200, scoped, tag = 'input window, operand 0, single buffered']
    #allocation3 [shape = 's32[2]{0}', space=sflag, size = 0x8, scoped, tag = 'scoped memory for tpu_custom_call.1']
    #allocation4 [shape = 'u8[512]{0}', space=smem, size = 0x200, scoped, tag = 'input window, operand 1, single buffered']
    #allocation5 [shape = 's32[1]{0}', space=sflag, size = 0x4, scoped, tag = 'scoped memory for tpu_custom_call.1']
    %10 = vsyncpa [#allocation3], 0
    %11 = vsyncpa [#allocation5], 0
    loop: start=0, step=1, limit=4
    $region2: #{tpu_custom_call.1} parent=1 // loop_pre_header
      _
    $region3: #{tpu_custom_call.1} parent=1 // loop_header
      %s13 = sphi 0, %s17
      %p14 = scmp.ge.s32.totalorder %s13, 4
      %s20 = sphi 0, %s32
      %s21 = sphi 0, %s28
      %s22 = sphi 0, %s20
      %s23 = sphi 0, %s21
      %s24 = sphi 0, %s22
      %s25 = sphi 0, %s23
      %s33 = sphi 0, %s33
      %s35 = sphi 0, %s33
      %s36 = sphi 0, %s35
      %s50 = sphi 0, %s36
      %s54 = sphi 0, %s54
      %s56 = sphi 0, %s54
      %s57 = sphi 0, %s56
      %s71 = sphi 0, %s57
      %s79 = sphi 0, %s81
      %s82 = sphi 0, %s79
      %s83 = sphi 0, %s82
      %s99 = sphi 0, %s83
      %s107 = sphi 0, %s109
      %s110 = sphi 0, %s107
      %s111 = sphi 0, %s110
      %s127 = sphi 0, %s111
      %s135 = sphi 0, %s137
      %s138 = sphi 0, %s135
      %s139 = sphi 0, %s138
      %s155 = sphi 0, %s139
    $region4: #{tpu_custom_call.1} parent=1 // loop_header_branch
      %16 = sbr.rel (%p14) target = $region8
    $region5: #{tpu_custom_call.1} parent=1 // loop_body
      %s18 = ssub.s32 %s13, 1
      %s19 = ssub.s32 %s13, 2
      %s26 = sadd.s32 1, %s21
      %p27 = scmp.ge.s32.totalorder %s26, 1
      %s28 = scalar_select %p27, 0, %s26
      %s29 = sadd.s32 1, %s20
      %s30 = scalar_select %p27, %s29, %s20
      %p31 = scmp.ge.s32.totalorder %s30, 2
      %s32 = scalar_select %p31, 0, %s30
      %s34 = sadd.s32 %s33, 1
      %p37 = scmp.eq.s32.totalorder %s13, 1
      %p38 = scmp.ne.s32.totalorder %s33, %s35
      %p39 = scmp.eq.s32.totalorder %s13, 0
      %p40 = por %p38, %p39
      %p41 = scmp.ne.s32.totalorder %s33, %s35
      %p42 = scmp.eq.s32.totalorder %s18, 1
      %p43 = por %p41, %p42
      %p44 = scmp.ne.s32.totalorder %s35, %s36
      %p45 = scmp.eq.s32.totalorder %s18, 0
      %p46 = por %p44, %p45
      %p47 = scmp.ne.s32.totalorder %s35, %s36
      %p48 = scmp.eq.s32.totalorder %s19, 1
      %p49 = por %p47, %p48
      %p51 = scmp.ne.s32.totalorder %s36, %s50
      %p52 = scmp.eq.s32.totalorder %s19, 0
      %p53 = por %p51, %p52
      %s55 = sadd.s32 %s54, 1
      %p58 = scmp.eq.s32.totalorder %s13, 1
      %p59 = scmp.ne.s32.totalorder %s54, %s56
      %p60 = scmp.eq.s32.totalorder %s13, 0
      %p61 = por %p59, %p60
      %p62 = scmp.ne.s32.totalorder %s54, %s56
      %p63 = scmp.eq.s32.totalorder %s18, 1
      %p64 = por %p62, %p63
      %p65 = scmp.ne.s32.totalorder %s56, %s57
      %p66 = scmp.eq.s32.totalorder %s18, 0
      %p67 = por %p65, %p66
      %p68 = scmp.ne.s32.totalorder %s56, %s57
      %p69 = scmp.eq.s32.totalorder %s19, 1
      %p70 = por %p68, %p69
      %p72 = scmp.ne.s32.totalorder %s57, %s71
      %p73 = scmp.eq.s32.totalorder %s19, 0
      %p74 = por %p72, %p73
      %s75 = ssub.s32 %s20, %s32
      %s76 = ssub.s32 %s21, %s28
      %s77 = sor.u32 %s75, %s76
      %p78 = scmp.eq.s32.totalorder %s77, 0
      %s80 = sadd.s32 %s79, 1
      %s81 = scalar_select %p78, %s79, %s80
      %p84 = pneg %p78
      %p85 = scmp.eq.s32.totalorder %s13, 1
      %p86 = por %p84, %p85
      %p87 = scmp.ne.s32.totalorder %s79, %s82
      %p88 = scmp.eq.s32.totalorder %s13, 0
      %p89 = por %p87, %p88
      %p90 = scmp.ne.s32.totalorder %s79, %s82
      %p91 = scmp.eq.s32.totalorder %s18, 1
      %p92 = por %p90, %p91
      %p93 = scmp.ne.s32.totalorder %s82, %s83
      %p94 = scmp.eq.s32.totalorder %s18, 0
      %p95 = por %p93, %p94
      %p96 = scmp.ne.s32.totalorder %s82, %s83
      %p97 = scmp.eq.s32.totalorder %s19, 1
      %p98 = por %p96, %p97
      %p100 = scmp.ne.s32.totalorder %s83, %s99
      %p101 = scmp.eq.s32.totalorder %s19, 0
      %p102 = por %p100, %p101
      %s103 = ssub.s32 %s20, %s32
      %s104 = ssub.s32 %s21, %s28
      %s105 = sor.u32 %s103, %s104
      %p106 = scmp.eq.s32.totalorder %s105, 0
      %s108 = sadd.s32 %s107, 1
      %s109 = scalar_select %p106, %s107, %s108
      %p112 = pneg %p106
      %p113 = scmp.eq.s32.totalorder %s13, 1
      %p114 = por %p112, %p113
      %p115 = scmp.ne.s32.totalorder %s107, %s110
      %p116 = scmp.eq.s32.totalorder %s13, 0
      %p117 = por %p115, %p116
      %p118 = scmp.ne.s32.totalorder %s107, %s110
      %p119 = scmp.eq.s32.totalorder %s18, 1
      %p120 = por %p118, %p119
      %p121 = scmp.ne.s32.totalorder %s110, %s111
      %p122 = scmp.eq.s32.totalorder %s18, 0
      %p123 = por %p121, %p122
      %p124 = scmp.ne.s32.totalorder %s110, %s111
      %p125 = scmp.eq.s32.totalorder %s19, 1
      %p126 = por %p124, %p125
      %p128 = scmp.ne.s32.totalorder %s111, %s127
      %p129 = scmp.eq.s32.totalorder %s19, 0
      %p130 = por %p128, %p129
      %s131 = ssub.s32 %s20, %s32
      %s132 = ssub.s32 %s21, %s28
      %s133 = sor.u32 %s131, %s132
      %p134 = scmp.eq.s32.totalorder %s133, 0
      %s136 = sadd.s32 %s135, 1
      %s137 = scalar_select %p134, %s135, %s136
      %p140 = pneg %p134
      %p141 = scmp.eq.s32.totalorder %s13, 1
      %p142 = por %p140, %p141
      %p143 = scmp.ne.s32.totalorder %s135, %s138
      %p144 = scmp.eq.s32.totalorder %s13, 0
      %p145 = por %p143, %p144
      %p146 = scmp.ne.s32.totalorder %s135, %s138
      %p147 = scmp.eq.s32.totalorder %s18, 1
      %p148 = por %p146, %p147
      %p149 = scmp.ne.s32.totalorder %s138, %s139
      %p150 = scmp.eq.s32.totalorder %s18, 0
      %p151 = por %p149, %p150
      %p152 = scmp.ne.s32.totalorder %s138, %s139
      %p153 = scmp.eq.s32.totalorder %s19, 1
      %p154 = por %p152, %p153
      %p156 = scmp.ne.s32.totalorder %s139, %s155
      %p157 = scmp.eq.s32.totalorder %s19, 0
      %p158 = por %p156, %p157
      %p159 = scmp.le.s32.totalorder 1, %s13
      %p160 = scmp.lt.s32.totalorder %s13, 3
      %p161 = pnand %p159, %p160
      %p162 = pneg %p161
      // Predicated region
      $region9: #{tpu_custom_call.1} parent=5 // pred_check
        _
      $region10: #{tpu_custom_call.1} parent=5 // pred_check_branch
        %164 = sbr.rel (%p161) target = $region12
      $region11: #{tpu_custom_call.1} parent=5 // pred_region
        %s165 = ssub.s32 %s13, 1
        // Predicated region
        $region13: #{tpu_custom_call.1} parent=11 // pred_check
          %p166 = pneg %p46
        $region14: #{tpu_custom_call.1} parent=11 // pred_check_branch
          %168 = sbr.rel (%p166) target = $region16
        $region15: #{tpu_custom_call.1} parent=11 // pred_region
          %s170 = ssub.s32 16, 16
          %171 = vsyncadd [#allocation3], %s170
          %s173 = sshll.u32 %s0, 4
          %s174 = int_to_ptr.vmem [resolvable:$true] %s173
          %176 = dma.vmem_to_smem %s174, 16, [#allocation2], [#allocation3]
        $region16: #{tpu_custom_call.1} parent=11 // pred_fallthru
          _
        // Predicated region
        $region17: #{tpu_custom_call.1} parent=11 // pred_check
          %p177 = pneg %p67
        $region18: #{tpu_custom_call.1} parent=11 // pred_check_branch
          %179 = sbr.rel (%p177) target = $region20
        $region19: #{tpu_custom_call.1} parent=11 // pred_region
          %s181 = ssub.s32 16, 16
          %182 = vsyncadd [#allocation5], %s181
          %s184 = sshll.u32 %s1, 4
          %s185 = int_to_ptr.vmem [resolvable:$true] %s184
          %187 = dma.vmem_to_smem %s185, 16, [#allocation4], [#allocation5]
        $region20: #{tpu_custom_call.1} parent=11 // pred_fallthru
          _
      $region12: #{tpu_custom_call.1} parent=5 // pred_fallthru
        _
      %p188 = scmp.lt.s32.totalorder %s13, 2
      // Predicated region
      $region21: #{tpu_custom_call.1} parent=5 // pred_check
        %p189 = pneg %p188
      $region22: #{tpu_custom_call.1} parent=5 // pred_check_branch
        %191 = sbr.rel (%p189) target = $region24
      $region23: #{tpu_custom_call.1} parent=5 // pred_region
        // Predicated region
        $region25: #{tpu_custom_call.1} parent=23 // pred_check
          %p192 = pneg %p89
        $region26: #{tpu_custom_call.1} parent=23 // pred_check_branch
          %194 = sbr.rel (%p192) target = $region28
        $region27: #{tpu_custom_call.1} parent=23 // pred_region
          %p195 = scmp.lt.s32.totalorder %s20, 1
          %s196 = scalar_select %p195, %s20, 1
          %p197 = scmp.lt.s32.totalorder %s21, 0
          %s198 = scalar_select %p197, %s21, 0
          %s199 = smul.addr %s196, 2
          %s200 = sadd.s32 %s198, %s199
          %s201 = smul.addr %s200, 8
          %s202 = scalar_lea.vmem %s2, %s201
        $region28: #{tpu_custom_call.1} parent=23 // pred_fallthru
          _
      $region24: #{tpu_custom_call.1} parent=5 // pred_fallthru
        _
      %p203 = scmp.le.s32.totalorder 1, %s13
      %p204 = scmp.lt.s32.totalorder %s13, 3
      %p205 = pnand %p203, %p204
      %p206 = pneg %p205
      // Predicated region
      $region29: #{tpu_custom_call.1} parent=5 // pred_check
        _
      $region30: #{tpu_custom_call.1} parent=5 // pred_check_branch
        %208 = sbr.rel (%p205) target = $region32
      $region31: #{tpu_custom_call.1} parent=5 // pred_region
        %s209 = ssub.s32 %s13, 1
        // Predicated region
        $region33: #{tpu_custom_call.1} parent=31 // pred_check
          %p210 = pneg %p46
        $region34: #{tpu_custom_call.1} parent=31 // pred_check_branch
          %212 = sbr.rel (%p210) target = $region36
        $region35: #{tpu_custom_call.1} parent=31 // pred_region
          %213 = dma.done [#allocation3], 16
        $region36: #{tpu_custom_call.1} parent=31 // pred_fallthru
          _
        // Predicated region
        $region37: #{tpu_custom_call.1} parent=31 // pred_check
          %p214 = pneg %p67
        $region38: #{tpu_custom_call.1} parent=31 // pred_check_branch
          %216 = sbr.rel (%p214) target = $region40
        $region39: #{tpu_custom_call.1} parent=31 // pred_region
          %217 = dma.done [#allocation5], 16
        $region40: #{tpu_custom_call.1} parent=31 // pred_fallthru
          _
        %218 = sfence
        %p219 = pneg %p46
        %p220 = pneg %p43
        %p221 = pneg %p67
        %p222 = pneg %p64
        %p223 = scmp.lt.s32.totalorder %s22, 1
        %s224 = scalar_select %p223, %s22, 1
        %p225 = scmp.lt.s32.totalorder %s23, 0
        %s226 = scalar_select %p225, %s23, 0
        %s227 = smul.addr %s224, 2
        %s228 = sadd.s32 %s226, %s227
        %s229 = smul.addr %s228, 8
        %s230 = scalar_lea.vmem %s2, %s229
        %p231 = pneg %p95
        %p232 = pneg %p92
        %p233 = pneg %p123
        %p234 = pneg %p120
        %p235 = scmp.lt.s32.totalorder %s22, 1
        %s236 = scalar_select %p235, %s22, 1
        %p237 = scmp.lt.s32.totalorder %s23, 0
        %s238 = scalar_select %p237, %s23, 0
        %s239 = smul.addr %s236, 2
        %s240 = sadd.s32 %s238, %s239
        %s241 = smul.addr %s240, 8
        %s242 = scalar_lea.vmem %s3, %s241
        %p243 = pneg %p151
        %p244 = pneg %p148
        %p245 = scmp.lt.s32.totalorder %s22, 1
        %s246 = scalar_select %p245, %s22, 1
        %p247 = scmp.lt.s32.totalorder %s23, 0
        %s248 = scalar_select %p247, %s23, 0
        %s249 = smul.addr %s246, 2
        %s250 = sadd.s32 %s248, %s249
        %s251 = smul.addr %s250, 8
        %s252 = scalar_lea.vmem %s4, %s251
        %p253 = scmp.lt.s32.totalorder %s22, 1
        %s254 = scalar_select %p253, %s22, 1
        %p255 = scmp.lt.s32.totalorder %s23, 0
        %s256 = scalar_select %p255, %s23, 0
        %s257 = smul.addr %s254, 2
        %s258 = sadd.s32 %s256, %s257
        %s259 = smul.addr %s258, 8
        %s260 = scalar_lea.vmem %s2, %s259
        %p261 = scmp.lt.s32.totalorder %s22, 1
        %s262 = scalar_select %p261, %s22, 1
        %p263 = scmp.lt.s32.totalorder %s23, 0
        %s264 = scalar_select %p263, %s23, 0
        %s265 = smul.addr %s262, 2
        %s266 = sadd.s32 %s264, %s265
        %s267 = smul.addr %s266, 8
        %s268 = scalar_lea.vmem %s3, %s267
        %p269 = scmp.lt.s32.totalorder %s22, 1
        %s270 = scalar_select %p269, %s22, 1
        %p271 = scmp.lt.s32.totalorder %s23, 0
        %s272 = scalar_select %p271, %s23, 0
        %s273 = smul.addr %s270, 2
        %s274 = sadd.s32 %s272, %s273
        %s275 = smul.addr %s274, 8
        %s276 = scalar_lea.vmem %s4, %s275
        %v277 = vld [vmem:[%s260] sm:$0xff]
        %v278 = vld [vmem:[%s260 + $0x8] sm:$0xff]
        %v279 = vlaneseq
        %v280 = vshrl.u32 %v279, 7
        %v281 = vsub.s32 0, %v280
        %v282 = vrot.slane %v277, %v281
        %v283 = vlaneseq
        %v284 = vshrl.u32 %v283, 7
        %v285 = vsub.s32 7, %v284
        %v286 = vrot.slane %v278, %v285
        %vm289 = vcmask 1042432
        %v290 = vrot.slane %v277, 5
        %v291 = vrot.slane %v278, 5
        %v292 = vsel %vm289, %v290, %v291
        %v296 = vsel %vm289, %v282, %v290
        %v297 = vsel %vm289, %v291, %v286
        %s298 = sld [smem:[#allocation2]]
        %v299 = vstv %s298
        %v300 = vmul.f32 %v277, %v299
        %v301 = vmul.f32 %v278, %v299
        %s302 = sld [smem:[#allocation4]]
        %v303 = vstv %s302
        %v304 = vadd.f32 %v300, %v303
        %v305 = vadd.f32 %v301, %v303
        %s306 = sld [smem:[#allocation2 + $0x1]]
        %v307 = vstv %s306
        %v308 = vmul.f32 %v277, %v307
        %v309 = vmul.f32 %v278, %v307
        %s310 = sld [smem:[#allocation4 + $0x1]]
        %v311 = vstv %s310
        %v312 = vadd.f32 %v308, %v311
        %v313 = vadd.f32 %v309, %v311
        %s314 = sld [smem:[#allocation2 + $0x2]]
        %v315 = vstv %s314
        %v316 = vmul.f32 %v277, %v315
        %v317 = vmul.f32 %v278, %v315
        %s318 = sld [smem:[#allocation4 + $0x2]]
        %v319 = vstv %s318
        %v320 = vadd.f32 %v316, %v319
        %v321 = vadd.f32 %v317, %v319
        %v322 = vmax.f32 %v304, %v312
        %v323 = vmax.f32 %v305, %v313
        %v324 = vmax.f32 %v322, %v320
        %v325 = vmax.f32 %v323, %v321
        %vm328 = vcmask 1046528
        %v329 = vrot.slane %v296, 1
        %v330 = vrot.slane %v292, 1
        %v331 = vsel %vm328, %v329, %v330
        %v332 = vrot.slane %v297, 1
        %v333 = vsel %vm328, %v330, %v332
        %v337 = vadd.f32 %v296, %v331
        %v338 = vadd.f32 %v292, %v333
        %v339 = vadd.f32 %v297, %v332
        %vm340 = vcmask 1045504
        %v341 = vrot.slane %v296, 2
        %v342 = vrot.slane %v292, 2
        %v343 = vsel %vm340, %v341, %v342
        %v344 = vrot.slane %v297, 2
        %v345 = vsel %vm340, %v342, %v344
        %v349 = vadd.f32 %v337, %v343
        %v350 = vadd.f32 %v338, %v345
        %v351 = vadd.f32 %v339, %v344
        %v352 = vmul.f32 %v349, 0.33333334
        %v353 = vmul.f32 %v350, 0.33333334
        %v354 = vmul.f32 %v351, 0.33333334
        %v355 = vsub.f32 %v304, %v324
        %v356 = vsub.f32 %v305, %v325
        %v357 = vmul.f32 %v355, 1.442695
        %v358 = vpow.pop %v357
        %v359 = vmul.f32 %v356, 1.442695
        %v360 = vpow.pop %v359
        %v361 = vadd.f32 %v358, 0.0
        %v362 = vadd.f32 %v360, 0.0
        %vm365 = vcmask 1041408
        %v366 = vrot.slane %v358, 6
        %v367 = vrot.slane %v360, 6
        %v368 = vsel %vm365, %v366, %v367
        %v372 = vmul.f32 %v352, %v366
        %v373 = vmul.f32 %v353, %v368
        %v374 = vmul.f32 %v354, %v367
        %v375 = vadd.f32 %v372, 0.0
        %v376 = vadd.f32 %v373, 0.0
        %v377 = vadd.f32 %v374, 0.0
        %vm378 = vcmask 1044480
        %v379 = vrot.slane %v296, 3
        %v380 = vrot.slane %v292, 3
        %v381 = vsel %vm378, %v379, %v380
        %v382 = vrot.slane %v297, 3
        %v383 = vsel %vm378, %v380, %v382
        %v387 = vadd.f32 %v349, %v381
        %v388 = vadd.f32 %v350, %v383
        %v389 = vadd.f32 %v351, %v382
        %vm390 = vcmask 1043456
        %v391 = vrot.slane %v296, 4
        %v392 = vrot.slane %v292, 4
        %v393 = vsel %vm390, %v391, %v392
        %v394 = vrot.slane %v297, 4
        %v395 = vsel %vm390, %v392, %v394
        %v399 = vadd.f32 %v387, %v393
        %v400 = vadd.f32 %v388, %v395
        %v401 = vadd.f32 %v389, %v394
        %v402 = vmul.f32 %v399, 0.2
        %v403 = vmul.f32 %v400, 0.2
        %v404 = vmul.f32 %v401, 0.2
        %v405 = vsub.f32 %v312, %v324
        %v406 = vsub.f32 %v313, %v325
        %v407 = vmul.f32 %v405, 1.442695
        %v408 = vpow.pop %v407
        %v409 = vmul.f32 %v406, 1.442695
        %v410 = vpow.pop %v409
        %v411 = vadd.f32 %v361, %v408
        %v412 = vadd.f32 %v362, %v410
        %vm415 = vcmask 1040384
        %v416 = vrot.slane %v408, 7
        %v417 = vrot.slane %v410, 7
        %v418 = vsel %vm415, %v416, %v417
        %v422 = vmul.f32 %v402, %v416
        %v423 = vmul.f32 %v403, %v418
        %v424 = vmul.f32 %v404, %v417
        %v428 = vrot.slane %v422, 7
        %v429 = vrot.slane %v423, 7
        %v430 = vsel %vm415, %v428, %v429
        %v431 = vrot.slane %v424, 7
        %v432 = vsel %vm415, %v429, %v431
        %v436 = vadd.f32 %v375, %v428
        %v437 = vadd.f32 %v376, %v430
        %v438 = vadd.f32 %v377, %v432
        %v439 = vrot.slane %v296, 5
        %v440 = vrot.slane %v292, 5
        %v441 = vsel %vm289, %v439, %v440
        %v442 = vrot.slane %v297, 5
        %v443 = vsel %vm289, %v440, %v442
        %v446 = vadd.f32 %v399, %v441
        %v447 = vadd.f32 %v400, %v443
        %v448 = vrot.slane %v296, 6
        %v449 = vrot.slane %v292, 6
        %v450 = vsel %vm365, %v448, %v449
        %v451 = vrot.slane %v297, 6
        %v452 = vsel %vm365, %v449, %v451
        %v455 = vadd.f32 %v446, %v450
        %v456 = vadd.f32 %v447, %v452
        %v457 = vmul.f32 %v455, 0.14285715
        %v458 = vmul.f32 %v456, 0.14285715
        %v459 = vsub.f32 %v320, %v324
        %v460 = vsub.f32 %v321, %v325
        %v461 = vmul.f32 %v459, 1.442695
        %v462 = vpow.pop %v461
        %v463 = vmul.f32 %v460, 1.442695
        %v464 = vpow.pop %v463
        %v465 = vadd.f32 %v411, %v462
        %v466 = vadd.f32 %v412, %v464
        %v467 = vmul.f32 %v457, %v462
        %v468 = vmul.f32 %v458, %v464
        %v471 = vrot.slane %v467, 6
        %v472 = vrot.slane %v468, 6
        %v473 = vsel %vm365, %v471, %v472
        %v477 = vadd.f32 %v436, %v471
        %v478 = vadd.f32 %v437, %v473
        %v479 = vadd.f32 %v438, %v472
        %v480 = vrcp.pop %v465
        %v481 = vrcp.pop %v466
        %v482 = vmul.f32 %v465, %v480
        %v483 = vmul.f32 %v466, %v481
        %v484 = vsub.f32 2.0, %v482
        %v485 = vsub.f32 2.0, %v483
        %v486 = vmul.f32 %v480, %v484
        %v487 = vmul.f32 %v481, %v485
        %v490 = vrot.slane %v486, 6
        %v491 = vrot.slane %v487, 6
        %v492 = vsel %vm365, %v490, %v491
        %v496 = vmul.f32 %v477, %v490
        %v497 = vmul.f32 %v478, %v492
        %v498 = vmul.f32 %v479, %v491
        %vm499 = vcmask 64514
        %500 = vst.msk [vmem:[%s276 - $0x2] sm:$0xfc] %vm499, %v496
        %vm501 = vcmask 64512
        %502 = vst.msk [vmem:[%s276 + $0x6] sm:$0xff] %vm501, %v497
        %vm503 = vcmask 58368
        %504 = vst.msk [vmem:[%s276 + $0xe] sm:$0x3] %vm503, %v498
        %v508 = vrot.slane %v496, 2
        %v509 = vrot.slane %v497, 2
        %v510 = vsel %vm340, %v508, %v509
        %v511 = vrot.slane %v498, 2
        %v512 = vsel %vm340, %v509, %v511
        %v515 = vsub.f32 %v277, %v510
        %v516 = vsub.f32 %v278, %v512
        %517 = vst.msk [vmem:[%s268] sm:$0xff] %vm501, %v515
        %518 = vst.msk [vmem:[%s268 + $0x8] sm:$0xff] %vm501, %v516
        %p519 = scmp.lt.s32.totalorder %s22, 1
        %s520 = scalar_select %p519, %s22, 1
        %p521 = scmp.lt.s32.totalorder %s23, 0
        %s522 = scalar_select %p521, %s23, 0
        %s523 = smul.addr %s520, 2
        %s524 = sadd.s32 %s522, %s523
        %s525 = smul.addr %s524, 8
        %s526 = scalar_lea.vmem %s3, %s525
        %p527 = scmp.lt.s32.totalorder %s22, 1
        %s528 = scalar_select %p527, %s22, 1
        %p529 = scmp.lt.s32.totalorder %s23, 0
        %s530 = scalar_select %p529, %s23, 0
        %s531 = smul.addr %s528, 2
        %s532 = sadd.s32 %s530, %s531
        %s533 = smul.addr %s532, 8
        %s534 = scalar_lea.vmem %s4, %s533
        // Predicated region
        $region41: #{tpu_custom_call.1} parent=31 // pred_check
          %p535 = pneg %p120
        $region42: #{tpu_custom_call.1} parent=31 // pred_check_branch
          %537 = sbr.rel (%p535) target = $region44
        $region43: #{tpu_custom_call.1} parent=31 // pred_region
          _
        $region44: #{tpu_custom_call.1} parent=31 // pred_fallthru
          _
        // Predicated region
        $region45: #{tpu_custom_call.1} parent=31 // pred_check
          %p538 = pneg %p148
        $region46: #{tpu_custom_call.1} parent=31 // pred_check_branch
          %540 = sbr.rel (%p538) target = $region48
        $region47: #{tpu_custom_call.1} parent=31 // pred_region
          _
        $region48: #{tpu_custom_call.1} parent=31 // pred_fallthru
          _
      $region32: #{tpu_custom_call.1} parent=5 // pred_fallthru
        _
      %p541 = scmp.le.s32.totalorder 2, %s13
      // Predicated region
      $region49: #{tpu_custom_call.1} parent=5 // pred_check
        %p542 = pneg %p541
      $region50: #{tpu_custom_call.1} parent=5 // pred_check_branch
        %544 = sbr.rel (%p542) target = $region52
      $region51: #{tpu_custom_call.1} parent=5 // pred_region
        %s545 = ssub.s32 %s13, 2
        // Predicated region
        $region53: #{tpu_custom_call.1} parent=51 // pred_check
          %p546 = pneg %p126
        $region54: #{tpu_custom_call.1} parent=51 // pred_check_branch
          %548 = sbr.rel (%p546) target = $region56
        $region55: #{tpu_custom_call.1} parent=51 // pred_region
          %p549 = scmp.lt.s32.totalorder %s24, 1
          %s550 = scalar_select %p549, %s24, 1
          %p551 = scmp.lt.s32.totalorder %s25, 0
          %s552 = scalar_select %p551, %s25, 0
          %s553 = smul.addr %s550, 2
          %s554 = sadd.s32 %s552, %s553
          %s555 = smul.addr %s554, 8
          %s556 = scalar_lea.vmem %s3, %s555
        $region56: #{tpu_custom_call.1} parent=51 // pred_fallthru
          _
        // Predicated region
        $region57: #{tpu_custom_call.1} parent=51 // pred_check
          %p557 = pneg %p154
        $region58: #{tpu_custom_call.1} parent=51 // pred_check_branch
          %559 = sbr.rel (%p557) target = $region60
        $region59: #{tpu_custom_call.1} parent=51 // pred_region
          %p560 = scmp.lt.s32.totalorder %s24, 1
          %s561 = scalar_select %p560, %s24, 1
          %p562 = scmp.lt.s32.totalorder %s25, 0
          %s563 = scalar_select %p562, %s25, 0
          %s564 = smul.addr %s561, 2
          %s565 = sadd.s32 %s563, %s564
          %s566 = smul.addr %s565, 8
          %s567 = scalar_lea.vmem %s4, %s566
        $region60: #{tpu_custom_call.1} parent=51 // pred_fallthru
          _
      $region52: #{tpu_custom_call.1} parent=5 // pred_fallthru
        _
    $region6: #{tpu_custom_call.1} parent=1 // loop_footer
      %s17 = sadd.s32 1, %s13
    $region7: #{tpu_custom_call.1} parent=1 // loop_footer_branch
      %12 = sbr.rel target = $region3
    $region8: #{tpu_custom_call.1} parent=1 // loop_exit
      _
    %568 = vsyncpa [#allocation3], 1
    %s569 = scalar_lea.sflag [#allocation3], 1
    %570 = vsyncpa %s569, 1
    %571 = vsyncpa [#allocation5], 1

</llo_original>
